<compile_context>
chip_gen: v7x
topology: tpu7x:2x2x1
jax: 0.10.0
libtpu: 0.0.40
codegen_flags: <defaults>
</compile_context>

<pallas_src>
import functools

import jax
import jax.numpy as jnp
from jax.experimental import pallas as pl
from jax.experimental.pallas import tpu as pltpu

_LANES = 128
_SUBLANES = 8
_TARGET_BLOCK_BYTES = 8 * 1024 * 1024  # ~8 MiB per block (perf review, v7x)
# Odd 32-bit mixing constants (int32-representable).
_C1 = 1812433253          # 0x6C078965
_C2 = -1640531527         # 0x9E3779B9 as int32


def _round_down(x: int, m: int) -> int:
    return (x // m) * m


def _fmix32(v):
    """murmur3 32-bit finalizer: full-avalanche mix of uint32 lanes (pure VPU)."""
    v = v ^ (v >> jnp.uint32(16))
    v = v * jnp.uint32(0x85EBCA6B)
    v = v ^ (v >> jnp.uint32(13))
    v = v * jnp.uint32(0xC2B2AE35)
    v = v ^ (v >> jnp.uint32(16))
    return v


def _uniform_noise_kernel(seed_ref, x_ref, o_ref, *, a: float):
    # Per-block key (scalar-unit only, free w.r.t. VALU): seed and block id are
    # spread by large odd constants; the vector fmix32 below avalanches it.
    key = seed_ref[0] * jnp.int32(_C1) + pl.program_id(0) * jnp.int32(_C2)

    bm, bn = x_ref.shape
    row_i = jax.lax.broadcasted_iota(jnp.int32, (bm, bn), 0)
    col_i = jax.lax.broadcasted_iota(jnp.int32, (bm, bn), 1)
    idx = row_i * jnp.int32(bn) + col_i            # element index within block
    bits = _fmix32((idx ^ key).astype(jnp.uint32))  # counter-based PRNG

    # Top 24 random bits -> U[0,1); fold (u - 0.5) * 2a into one mul + sub:
    #   noise = u * (2a) - a  in  [-a, a)
    u = (bits >> jnp.uint32(8)).astype(jnp.float32)
    noise = u * jnp.float32(2.0 * a / float(1 << 24)) - jnp.float32(a)
    o_ref[...] = (x_ref[...].astype(jnp.float32) + noise).astype(o_ref.dtype)


def uniform_noise(x: jax.Array, a: float = 0.1, seed: int = 0,
                  *, donate_input: bool = False) -> jax.Array:
    """Pallas TPU implementation of deepinv UniformNoise.forward.

    y = x + eps,  eps ~ U(-a, a), elementwise, any input shape/dtype.
    """
    # TODO(synk): only a scalar amplitude `a` is supported (baked in at trace
    # time); the PyTorch module also allows a per-batch tensor `a`.
    orig_shape = x.shape
    dtype = x.dtype
    total = int(x.size)
    itemsize = jnp.dtype(dtype).itemsize

    # Lane-dense cols: largest of 1024/512/256/128 that divides total so the
    # reshape is zero-copy (no pad, no tail slice). Fallback: 128 + tiny pad.
    cols = _LANES
    for c in (1024, 512, 256, 128):
        if total % c == 0:
            cols = c
            break

    rows = -(-total // cols)          # == total // cols when divisible
    pad = rows * cols - total         # < 128 elements, only if total % 128 != 0

    xf = x.reshape(-1)
    if pad:
        # TODO(synk): for very large tensors with total % 128 != 0 an in-kernel
        # masked tail (scalar-prefetched `total`) would avoid this extra copy.
        xf = jnp.pad(xf, (0, pad))
    x2d = xf.reshape(rows, cols)

    # Row-block size: target ~8 MiB, multiple of 8 sublanes. Ragged final block
    # is handled by Pallas masking (grid = cdiv), no row padding to block_rows.
    if rows <= _SUBLANES:
        block_rows = rows             # single block, equals full array dim
    else:
        target = max(_SUBLANES, _TARGET_BLOCK_BYTES // (cols * itemsize))
        block_rows = min(max(_round_down(target, _SUBLANES), _SUBLANES),
                         max(_round_down(rows, _SUBLANES), _SUBLANES))
    grid = (pl.cdiv(rows, block_rows),)

    seed_arr = jnp.asarray([seed], dtype=jnp.int32)
    kernel = functools.partial(_uniform_noise_kernel, a=float(a))

    out2d = pl.pallas_call(
        kernel,
        out_shape=jax.ShapeDtypeStruct((rows, cols), dtype),
        grid_spec=pltpu.PrefetchScalarGridSpec(
            num_scalar_prefetch=1,    # seed lands in SMEM before the grid runs
            grid=grid,
            in_specs=[pl.BlockSpec((block_rows, cols), lambda i, *_: (i, 0))],
            out_specs=pl.BlockSpec((block_rows, cols), lambda i, *_: (i, 0)),
        ),
        compiler_params=pltpu.CompilerParams(
            # Independent blocks: let both v7x TensorCores stream HBM.
            dimension_semantics=("parallel",),
            # <= 2(in/out) * 2(double buffer) * 8 MiB = 32 MiB per-step footprint
            vmem_limit_bytes=48 * 1024 * 1024,
        ),
        # x2d -> out aliasing (inputs are read before overwrite; identical maps).
        input_output_aliases=({1: 0} if donate_input else {}),
    )(seed_arr, x2d)

    out = out2d
    if pad:
        out = out.reshape(-1)[:total]
    return out.reshape(orig_shape)


if __name__ == "__main__":
    key = jax.random.PRNGKey(0)
    x = jax.random.normal(key, (2, 4, 16, 16), dtype=jnp.float32)
    a = 0.1

    y = uniform_noise(x, a=a, seed=1234)
    y = jax.block_until_ready(y)

    assert y.shape == x.shape
    assert y.dtype == x.dtype

    eps = y - x
    # Noise must lie in [-a, a] and must not be identically zero.
    assert bool(jnp.all(jnp.abs(eps) <= a + 1e-5)), "noise outside [-a, a]"
    assert bool(jnp.any(eps != 0.0)), "noise is identically zero"

    # Determinism: same seed -> identical output.
    y2 = jax.block_until_ready(uniform_noise(x, a=a, seed=1234))
    assert bool(jnp.array_equal(y, y2)), "same seed must reproduce output"

    # Different seed -> different noise.
    y3 = jax.block_until_ready(uniform_noise(x, a=a, seed=77))
    assert bool(jnp.any(y3 != y)), "different seeds must differ"

    print("KERNEL_OK")
</pallas_src>

<mosaic_0001>
module attributes {stable_mosaic.version = 11 : i64} {
  func.func @_uniform_noise_kernel(%arg0: i32, %arg1: memref<1xi32, #tpu.memory_space<smem>>, %arg2: memref<2x1024xf32, #tpu.memory_space<vmem>>, %arg3: memref<2x1024xf32, #tpu.memory_space<vmem>>) attributes {dimension_semantics = [#tpu.dimension_semantics<parallel>], iteration_bounds = array<i64: 1>, scalar_prefetch = 1 : i64, scratch_operands = 0 : i64, tpu.core_type = #tpu.core_type<tc>, window_params = [{transform_indices = @transform_0, window_bounds = array<i64: 2, 1024>}, {transform_indices = @transform_1, window_bounds = array<i64: 2, 1024>}]} {
    %c0 = arith.constant 0 : index
    %0 = memref.load %arg1[%c0] : memref<1xi32, #tpu.memory_space<smem>>
    %c1812433253_i32 = arith.constant 1812433253 : i32
    %1 = arith.muli %0, %c1812433253_i32 : i32
    %c-1640531527_i32 = arith.constant -1640531527 : i32
    %2 = arith.muli %arg0, %c-1640531527_i32 : i32
    %3 = arith.addi %1, %2 : i32
    %4 = tpu.iota {dimensions = array<i32: 0>} : vector<2x1024xi32>
    %5 = tpu.iota {dimensions = array<i32: 1>} : vector<2x1024xi32>
    %c1024_i32 = arith.constant 1024 : i32
    %6 = vector.broadcast %c1024_i32 : i32 to vector<2x1024xi32>
    %7 = arith.muli %4, %6 : vector<2x1024xi32>
    %8 = arith.addi %7, %5 : vector<2x1024xi32>
    %9 = vector.broadcast %3 : i32 to vector<2x1024xi32>
    %10 = arith.xori %8, %9 : vector<2x1024xi32>
    %c16_i32 = arith.constant 16 : i32
    %11 = vector.broadcast %c16_i32 : i32 to vector<2x1024xi32>
    %12 = arith.shrui %10, %11 : vector<2x1024xi32>
    %13 = arith.xori %10, %12 : vector<2x1024xi32>
    %c-2048144789_i32 = arith.constant -2048144789 : i32
    %14 = vector.broadcast %c-2048144789_i32 : i32 to vector<2x1024xi32>
    %15 = arith.muli %13, %14 : vector<2x1024xi32>
    %c13_i32 = arith.constant 13 : i32
    %16 = vector.broadcast %c13_i32 : i32 to vector<2x1024xi32>
    %17 = arith.shrui %15, %16 : vector<2x1024xi32>
    %18 = arith.xori %15, %17 : vector<2x1024xi32>
    %c-1028477387_i32 = arith.constant -1028477387 : i32
    %19 = vector.broadcast %c-1028477387_i32 : i32 to vector<2x1024xi32>
    %20 = arith.muli %18, %19 : vector<2x1024xi32>
    %c16_i32_0 = arith.constant 16 : i32
    %21 = vector.broadcast %c16_i32_0 : i32 to vector<2x1024xi32>
    %22 = arith.shrui %20, %21 : vector<2x1024xi32>
    %23 = arith.xori %20, %22 : vector<2x1024xi32>
    %c8_i32 = arith.constant 8 : i32
    %24 = vector.broadcast %c8_i32 : i32 to vector<2x1024xi32>
    %25 = arith.shrui %23, %24 : vector<2x1024xi32>
    %26 = arith.uitofp %25 : vector<2x1024xi32> to vector<2x1024xf32>
    %cst = arith.constant 1.19209291E-8 : f32
    %27 = vector.broadcast %cst : f32 to vector<2x1024xf32>
    %28 = arith.mulf %26, %27 : vector<2x1024xf32>
    %cst_1 = arith.constant 1.000000e-01 : f32
    %29 = vector.broadcast %cst_1 : f32 to vector<2x1024xf32>
    %30 = arith.subf %28, %29 : vector<2x1024xf32>
    %c0_2 = arith.constant 0 : index
    %c0_3 = arith.constant 0 : index
    %31 = vector.load %arg2[%c0_2, %c0_3] : memref<2x1024xf32, #tpu.memory_space<vmem>>, vector<2x1024xf32>
    %32 = arith.addf %31, %30 : vector<2x1024xf32>
    %c0_4 = arith.constant 0 : index
    %c0_5 = arith.constant 0 : index
    %33 = vector.load %arg3[%c0_4, %c0_5] : memref<2x1024xf32, #tpu.memory_space<vmem>>, vector<2x1024xf32>
    tpu.vector_store %arg3[%c0_4, %c0_5], %32 {strides = array<i32>} : memref<2x1024xf32, #tpu.memory_space<vmem>>, vector<2x1024xf32>,
    return
  }
  func.func @transform_0(%arg0: i32, %arg1: memref<1xi32, #tpu.memory_space<smem>>) -> (i32, i32) {
    %c0_i32 = arith.constant 0 : i32
    %c0_i32_0 = arith.constant 0 : i32
    return %arg0, %c0_i32 : i32, i32
  }
  func.func @transform_1(%arg0: i32, %arg1: memref<1xi32, #tpu.memory_space<smem>>) -> (i32, i32) {
    %c0_i32 = arith.constant 0 : i32
    %c0_i32_0 = arith.constant 0 : i32
    return %arg0, %c0_i32 : i32, i32
  }
}

</mosaic_0001>

<llo_original>
// kernel: tpu_custom_call.1
$region0: #{tpu_custom_call.1}
  #allocation0 [shape = 'u32[]', space=smem, size = 0x4, offset = 0x4, fixed_abs, tag = 'smem constant byte address 0x4 - core index']
  #allocation1 [shape = 'u32[144,128]{1,0:T(1,128)}', space=vmem, size = 0x12000, scoped, tag = 'internal scratch']
  #allocation2 [shape = 's32[1]{0}', space=sflag, size = 0x4, scoped, tag = 'scoped memory for tpu_custom_call.1']
  #allocation3 [shape = 's32[1]{0:T(128)S(6)}', space=smem, size = 0x200, scoped, tag = 'prefetched SMEM operand 0']
  %s0 = inlined_call_operand.<no memory space> [shape: s32[1], index: 0, kind: input, shape index: {}]
  %s1 = inlined_call_operand.hbm [shape: f32[2,1024], index: 1, kind: input, shape index: {}]
  %s2 = inlined_call_operand.hbm [shape: f32[2,1024], index: 2, kind: output, shape index: {}]
  %s3 = sld [smem:[#allocation0]]
  $region18: #{tpu_custom_call.1} parent=0
    _
  %s5 = ssub.s32 1, %s3
  %s6 = scalar_select 0, %s5, %s3
  %7 = sst [smem:[#allocation3]] %s0
  $region1: #{tpu_custom_call.1} parent=0
    #allocation4 [shape = 'u8[8192]{0}', space=vmem, size = 0x2000, scoped, tag = 'input window, operand 1, single buffered']
    #allocation5 [shape = 's32[1]{0}', space=sflag, size = 0x4, scoped, tag = 'scoped memory for tpu_custom_call.1']
    #allocation6 [shape = 's32[1]{0}', space=sflag, size = 0x4, scoped, tag = 'scoped memory for tpu_custom_call.1']
    #allocation7 [shape = 'u8[8192]{0}', space=vmem, size = 0x2000, scoped, tag = 'output window, operand 0, single buffered']
    %8 = vsyncpa [#allocation5], 0
    %9 = vsyncpa [#allocation6], 0
    // Predicated region
    $region2: #{tpu_custom_call.1} parent=1 // pred_check
      _
    $region3: #{tpu_custom_call.1} parent=1 // pred_check_branch
      %11 = sbr.rel (0) target = $region5
    $region4: #{tpu_custom_call.1} parent=1 // pred_region
      %s13 = ssub.s32 256, 256
      %14 = vsyncadd [#allocation5], %s13
      %s16 = sshll.u32 [#allocation4], 4
      %s17 = int_to_ptr.vmem [resolvable:$true] %s16
      %19 = dma.hbm_to_vmem [thread:$0]  %s1, 256, %s17, [#allocation5]
    $region5: #{tpu_custom_call.1} parent=1 // pred_fallthru
      _
    // Predicated region
    $region6: #{tpu_custom_call.1} parent=1 // pred_check
      _
    $region7: #{tpu_custom_call.1} parent=1 // pred_check_branch
      %21 = sbr.rel (0) target = $region9
    $region8: #{tpu_custom_call.1} parent=1 // pred_region
      %22 = dma.done [#allocation5], 256
    $region9: #{tpu_custom_call.1} parent=1 // pred_fallthru
      _
    %s23 = sld [smem:[#allocation3]]
    %s24 = smul.u32 %s23, 1812433253
    %s25 = smul.u32 0, 2654435769
    %s26 = sadd.s32 %s24, %s25
    %v27 = vlaneseq
    %v28 = vshrl.u32 %v27, 7
    %v29 = vlaneseq
    %v30 = vand.u32 %v29, 127
    %v31 = vadd.s32 %v30, 128
    %v32 = vadd.s32 %v30, 256
    %v33 = vadd.s32 %v30, 384
    %v34 = vadd.s32 %v30, 512
    %v35 = vadd.s32 %v30, 640
    %v36 = vadd.s32 %v30, 768
    %v37 = vadd.s32 %v30, 896
    %v38 = vmul.u32 %v28, 1024
    %v39 = vadd.s32 %v38, %v30
    %v40 = vadd.s32 %v38, %v31
    %v41 = vadd.s32 %v38, %v32
    %v42 = vadd.s32 %v38, %v33
    %v43 = vadd.s32 %v38, %v34
    %v44 = vadd.s32 %v38, %v35
    %v45 = vadd.s32 %v38, %v36
    %v46 = vadd.s32 %v38, %v37
    %v47 = vstv %s26
    %v48 = vxor.u32 %v39, %v47
    %v49 = vxor.u32 %v40, %v47
    %v50 = vxor.u32 %v41, %v47
    %v51 = vxor.u32 %v42, %v47
    %v52 = vxor.u32 %v43, %v47
    %v53 = vxor.u32 %v44, %v47
    %v54 = vxor.u32 %v45, %v47
    %v55 = vxor.u32 %v46, %v47
    %v56 = vshrl.u32 %v48, 16
    %v57 = vshrl.u32 %v49, 16
    %v58 = vshrl.u32 %v50, 16
    %v59 = vshrl.u32 %v51, 16
    %v60 = vshrl.u32 %v52, 16
    %v61 = vshrl.u32 %v53, 16
    %v62 = vshrl.u32 %v54, 16
    %v63 = vshrl.u32 %v55, 16
    %v64 = vxor.u32 %v48, %v56
    %v65 = vxor.u32 %v49, %v57
    %v66 = vxor.u32 %v50, %v58
    %v67 = vxor.u32 %v51, %v59
    %v68 = vxor.u32 %v52, %v60
    %v69 = vxor.u32 %v53, %v61
    %v70 = vxor.u32 %v54, %v62
    %v71 = vxor.u32 %v55, %v63
    %v72 = vmul.u32 %v64, 2246822507
    %v73 = vmul.u32 %v65, 2246822507
    %v74 = vmul.u32 %v66, 2246822507
    %v75 = vmul.u32 %v67, 2246822507
    %v76 = vmul.u32 %v68, 2246822507
    %v77 = vmul.u32 %v69, 2246822507
    %v78 = vmul.u32 %v70, 2246822507
    %v79 = vmul.u32 %v71, 2246822507
    %v80 = vshrl.u32 %v72, 13
    %v81 = vshrl.u32 %v73, 13
    %v82 = vshrl.u32 %v74, 13
    %v83 = vshrl.u32 %v75, 13
    %v84 = vshrl.u32 %v76, 13
    %v85 = vshrl.u32 %v77, 13
    %v86 = vshrl.u32 %v78, 13
    %v87 = vshrl.u32 %v79, 13
    %v88 = vxor.u32 %v72, %v80
    %v89 = vxor.u32 %v73, %v81
    %v90 = vxor.u32 %v74, %v82
    %v91 = vxor.u32 %v75, %v83
    %v92 = vxor.u32 %v76, %v84
    %v93 = vxor.u32 %v77, %v85
    %v94 = vxor.u32 %v78, %v86
    %v95 = vxor.u32 %v79, %v87
    %v96 = vmul.u32 %v88, 3266489909
    %v97 = vmul.u32 %v89, 3266489909
    %v98 = vmul.u32 %v90, 3266489909
    %v99 = vmul.u32 %v91, 3266489909
    %v100 = vmul.u32 %v92, 3266489909
    %v101 = vmul.u32 %v93, 3266489909
    %v102 = vmul.u32 %v94, 3266489909
    %v103 = vmul.u32 %v95, 3266489909
    %v104 = vshrl.u32 %v96, 16
    %v105 = vshrl.u32 %v97, 16
    %v106 = vshrl.u32 %v98, 16
    %v107 = vshrl.u32 %v99, 16
    %v108 = vshrl.u32 %v100, 16
    %v109 = vshrl.u32 %v101, 16
    %v110 = vshrl.u32 %v102, 16
    %v111 = vshrl.u32 %v103, 16
    %v112 = vxor.u32 %v96, %v104
    %v113 = vxor.u32 %v97, %v105
    %v114 = vxor.u32 %v98, %v106
    %v115 = vxor.u32 %v99, %v107
    %v116 = vxor.u32 %v100, %v108
    %v117 = vxor.u32 %v101, %v109
    %v118 = vxor.u32 %v102, %v110
    %v119 = vxor.u32 %v103, %v111
    %v120 = vshrl.u32 %v112, 8
    %v121 = vshrl.u32 %v113, 8
    %v122 = vshrl.u32 %v114, 8
    %v123 = vshrl.u32 %v115, 8
    %v124 = vshrl.u32 %v116, 8
    %v125 = vshrl.u32 %v117, 8
    %v126 = vshrl.u32 %v118, 8
    %v127 = vshrl.u32 %v119, 8
    %v128 = vshrl.u32 %v120, 16
    %v129 = vand.u32 %v120, 65535
    %v130 = vcvt.s32.f32 %v128
    %v131 = vmul.f32 %v130, 65536.0
    %v132 = vcvt.s32.f32 %v129
    %v133 = vadd.f32 %v131, %v132
    %v134 = vshrl.u32 %v121, 16
    %v135 = vand.u32 %v121, 65535
    %v136 = vcvt.s32.f32 %v134
    %v137 = vmul.f32 %v136, 65536.0
    %v138 = vcvt.s32.f32 %v135
    %v139 = vadd.f32 %v137, %v138
    %v140 = vshrl.u32 %v122, 16
    %v141 = vand.u32 %v122, 65535
    %v142 = vcvt.s32.f32 %v140
    %v143 = vmul.f32 %v142, 65536.0
    %v144 = vcvt.s32.f32 %v141
    %v145 = vadd.f32 %v143, %v144
    %v146 = vshrl.u32 %v123, 16
    %v147 = vand.u32 %v123, 65535
    %v148 = vcvt.s32.f32 %v146
    %v149 = vmul.f32 %v148, 65536.0
    %v150 = vcvt.s32.f32 %v147
    %v151 = vadd.f32 %v149, %v150
    %v152 = vshrl.u32 %v124, 16
    %v153 = vand.u32 %v124, 65535
    %v154 = vcvt.s32.f32 %v152
    %v155 = vmul.f32 %v154, 65536.0
    %v156 = vcvt.s32.f32 %v153
    %v157 = vadd.f32 %v155, %v156
    %v158 = vshrl.u32 %v125, 16
    %v159 = vand.u32 %v125, 65535
    %v160 = vcvt.s32.f32 %v158
    %v161 = vmul.f32 %v160, 65536.0
    %v162 = vcvt.s32.f32 %v159
    %v163 = vadd.f32 %v161, %v162
    %v164 = vshrl.u32 %v126, 16
    %v165 = vand.u32 %v126, 65535
    %v166 = vcvt.s32.f32 %v164
    %v167 = vmul.f32 %v166, 65536.0
    %v168 = vcvt.s32.f32 %v165
    %v169 = vadd.f32 %v167, %v168
    %v170 = vshrl.u32 %v127, 16
    %v171 = vand.u32 %v127, 65535
    %v172 = vcvt.s32.f32 %v170
    %v173 = vmul.f32 %v172, 65536.0
    %v174 = vcvt.s32.f32 %v171
    %v175 = vadd.f32 %v173, %v174
    %v176 = vmul.f32 %v133, 1.1920929e-08
    %v177 = vmul.f32 %v139, 1.1920929e-08
    %v178 = vmul.f32 %v145, 1.1920929e-08
    %v179 = vmul.f32 %v151, 1.1920929e-08
    %v180 = vmul.f32 %v157, 1.1920929e-08
    %v181 = vmul.f32 %v163, 1.1920929e-08
    %v182 = vmul.f32 %v169, 1.1920929e-08
    %v183 = vmul.f32 %v175, 1.1920929e-08
    %v184 = vsub.f32 %v176, 0.1
    %v185 = vsub.f32 %v177, 0.1
    %v186 = vsub.f32 %v178, 0.1
    %v187 = vsub.f32 %v179, 0.1
    %v188 = vsub.f32 %v180, 0.1
    %v189 = vsub.f32 %v181, 0.1
    %v190 = vsub.f32 %v182, 0.1
    %v191 = vsub.f32 %v183, 0.1
    %v192 = vld [vmem:[#allocation4] sm:$0xff]
    %v193 = vld [vmem:[#allocation4 + $0x8] sm:$0xff]
    %v202 = vcombine.low %v184, %v185
    %v203 = vcombine.low %v186, %v187
    %v205 = vunpack.c.l.s4 1983009808
    %v206 = vunpack.c.0.s8 %v205
    %v207 = vlaneseq
    %v208 = vshrl.u32 %v207, 7
    %v209 = vsub.s32 %v206, %v208
    %v210 = vrot.slane %v202, %v209
    %v212 = vunpack.c.l.s4 1983009808
    %v213 = vunpack.c.0.s8 %v212
    %v214 = vlaneseq
    %v215 = vshrl.u32 %v214, 7
    %v216 = vsub.s32 %v213, %v215
    %v217 = vrot.slane %v203, %v216
    %v218 = vcombine.low %v210, %v217
    %v219 = vcombine.low %v188, %v189
    %v220 = vcombine.low %v190, %v191
    %v222 = vunpack.c.l.s4 1983009808
    %v223 = vunpack.c.0.s8 %v222
    %v224 = vlaneseq
    %v225 = vshrl.u32 %v224, 7
    %v226 = vsub.s32 %v223, %v225
    %v227 = vrot.slane %v219, %v226
    %v229 = vunpack.c.l.s4 1983009808
    %v230 = vunpack.c.0.s8 %v229
    %v231 = vlaneseq
    %v232 = vshrl.u32 %v231, 7
    %v233 = vsub.s32 %v230, %v232
    %v234 = vrot.slane %v220, %v233
    %v235 = vcombine.low %v227, %v234
    %v238 = vadd.f32 %v192, %v218
    %v239 = vadd.f32 %v193, %v235
    %240 = vst [vmem:[#allocation7] sm:$0xff] %v238
    %241 = vst [vmem:[#allocation7 + $0x8] sm:$0xff] %v239
    // Predicated region
    $region10: #{tpu_custom_call.1} parent=1 // pred_check
      _
    $region11: #{tpu_custom_call.1} parent=1 // pred_check_branch
      %243 = sbr.rel (0) target = $region13
    $region12: #{tpu_custom_call.1} parent=1 // pred_region
      %s245 = ssub.s32 256, 256
      %246 = vsyncadd [#allocation6], %s245
      %s248 = sshll.u32 [#allocation7], 4
      %s249 = int_to_ptr.vmem [resolvable:$true] %s248
      %251 = dma.vmem_to_hbm [thread:$0]  %s249, 256, %s2, [#allocation6]
    $region13: #{tpu_custom_call.1} parent=1 // pred_fallthru
      _
    // Predicated region
    $region14: #{tpu_custom_call.1} parent=1 // pred_check
      _
    $region15: #{tpu_custom_call.1} parent=1 // pred_check_branch
      %253 = sbr.rel (0) target = $region17
    $region16: #{tpu_custom_call.1} parent=1 // pred_region
      %254 = dma.done [#allocation6], 256
    $region17: #{tpu_custom_call.1} parent=1 // pred_fallthru
      _
    %255 = vsyncpa [#allocation5], 1
    %256 = vsyncpa [#allocation6], 1

</llo_original>
